<compile_context>
chip_gen: v7x
topology: tpu7x:2x2x1
jax: 0.10.0
libtpu: 0.0.40
codegen_flags: <defaults>
</compile_context>

<pallas_src>
import jax
import jax.numpy as jnp
from jax.experimental import pallas as pl
from jax.experimental.pallas import tpu as pltpu

NEGATIVE_SLOPE = 0.5
C_IN = 63
C_OUT = 75


def _convt_leaky_kernel(x_ref, w_ref, b_ref, o_ref):
    # x_ref: (1, C_IN, tm)   spatial on lanes
    # w_ref: (C_OUT, C_IN)   transposed 1x1 conv weight
    # b_ref: (C_OUT, 1)
    # o_ref: (1, C_OUT, tm)
    y = jnp.dot(w_ref[...], x_ref[0], preferred_element_type=jnp.float32)
    y = y + b_ref[...]
    o_ref[0] = jnp.where(y > 0, y, y * NEGATIVE_SLOPE).astype(o_ref.dtype)


def conv_transpose_leaky(x_nchw, weight, bias, *, tm=2048):
    """x_nchw: (N, 63, H, W) float32
    weight:  (63, 75, 1, 1)  (PyTorch ConvTranspose2d layout: in, out, kH, kW)
    bias:    (75,)
    returns: (N, 75, H-2, W-2) float32  == where(v1>0, v1, 0.5*v1) in NCHW
    """
    assert tm % 128 == 0, "tm must be a multiple of 128 (lane width)"
    n, cin, h, w = x_nchw.shape
    assert cin == C_IN
    assert h >= 3 and w >= 3, "padding=1 on a 1x1 deconv needs spatial >= 3"
    ho, wo = h - 2, w - 2
    m = ho * wo

    # padding=1 on a 1x1/stride-1 transposed conv == crop one pixel per border.
    # Stay channels-first; no NCHW<->NHWC transposes.
    x_rows = x_nchw[:, :, 1:h - 1, 1:w - 1].reshape(n, C_IN, m)   # (N, 63, M)

    w_t = jnp.transpose(weight[:, :, 0, 0])          # (75, 63)
    b2d = bias.reshape(C_OUT, 1)                     # (75, 1)

    # Lane tile: full spatial extent for small images (full-dim block is always
    # legal), otherwise a big 128-multiple tile; uneven last tile is handled by
    # Pallas (out-of-bounds stores are dropped; computation is per-lane).
    tm_eff = m if m <= tm else tm
    n_tiles = pl.cdiv(m, tm_eff)

    out_flat = pl.pallas_call(
        _convt_leaky_kernel,
        out_shape=jax.ShapeDtypeStruct((n, C_OUT, m), jnp.float32),
        grid_spec=pltpu.PrefetchScalarGridSpec(
            num_scalar_prefetch=0,
            grid=(n, n_tiles),
            in_specs=[
                pl.BlockSpec((1, C_IN, tm_eff), lambda b, i: (b, 0, i)),
                pl.BlockSpec((C_OUT, C_IN), lambda b, i: (0, 0)),
                pl.BlockSpec((C_OUT, 1), lambda b, i: (0, 0)),
            ],
            out_specs=pl.BlockSpec((1, C_OUT, tm_eff), lambda b, i: (b, 0, i)),
        ),
        compiler_params=pltpu.CompilerParams(
            dimension_semantics=("parallel", "parallel")),
    )(x_rows, w_t, b2d)

    # TODO(synk): the reference module's trailing
    #   .permute(0, 1, 4, 2, 3).reshape(36339).permute(1, 0)
    # is invalid PyTorch and has no executable semantics to reproduce.
    return out_flat.reshape(n, C_OUT, ho, wo)


def make_params(key):
    kw, kb = jax.random.split(key)
    # Mimic PyTorch's uniform(-1/sqrt(fan), 1/sqrt(fan)); fan = in_ch * kH * kW.
    bound = 1.0 / jnp.sqrt(jnp.float32(C_IN))
    weight = jax.random.uniform(kw, (C_IN, C_OUT, 1, 1), jnp.float32,
                                minval=-bound, maxval=bound)
    bias = jax.random.uniform(kb, (C_OUT,), jnp.float32,
                              minval=-bound, maxval=bound)
    return weight, bias


def _reference(x, weight, bias):
    x_crop = x[:, :, 1:-1, 1:-1]
    v1 = jnp.einsum("nchw,co->nohw", x_crop, weight[:, :, 0, 0]) \
        + bias[None, :, None, None]
    return jnp.where(v1 > 0, v1, v1 * NEGATIVE_SLOPE)


if __name__ == "__main__":
    key = jax.random.PRNGKey(0)
    kx, kx2, kp = jax.random.split(key, 3)
    weight, bias = make_params(kp)

    # Small shape consistent with the module: (N, 63, H, W), single-tile path.
    x = jax.random.normal(kx, (2, 63, 16, 16), jnp.float32)
    out = jax.block_until_ready(conv_transpose_leaky(x, weight, bias))
    ref = _reference(x, weight, bias)
    assert out.shape == (2, 75, 14, 14), out.shape
    assert jnp.allclose(out, ref, atol=1e-4, rtol=1e-4)

    # Exercise the multi-tile / uneven-grid path (M = 18*21 = 378, tm = 128).
    x2 = jax.random.normal(kx2, (1, 63, 20, 23), jnp.float32)
    out2 = jax.block_until_ready(conv_transpose_leaky(x2, weight, bias, tm=128))
    ref2 = _reference(x2, weight, bias)
    assert out2.shape == (1, 75, 18, 21), out2.shape
    assert jnp.allclose(out2, ref2, atol=1e-4, rtol=1e-4)

    print("KERNEL_OK")
</pallas_src>

<mosaic_0001>
module attributes {stable_mosaic.version = 11 : i64} {
  func.func @_convt_leaky_kernel(%arg0: i32, %arg1: i32, %arg2: memref<1x63x196xf32, #tpu.memory_space<vmem>>, %arg3: memref<75x63xf32, #tpu.memory_space<vmem>>, %arg4: memref<75x1xf32, #tpu.memory_space<vmem>>, %arg5: memref<1x75x196xf32, #tpu.memory_space<vmem>>) attributes {dimension_semantics = [#tpu.dimension_semantics<parallel>, #tpu.dimension_semantics<parallel>], iteration_bounds = array<i64: 2, 1>, scalar_prefetch = 0 : i64, scratch_operands = 0 : i64, tpu.core_type = #tpu.core_type<tc>, window_params = [{transform_indices = @transform_0, window_bounds = array<i64: 1, 63, 196>}, {pipeline_mode = #tpu.pipeline_mode<synchronous>, transform_indices = @transform_1, window_bounds = array<i64: 75, 63>}, {pipeline_mode = #tpu.pipeline_mode<synchronous>, transform_indices = @transform_2, window_bounds = array<i64: 75, 1>}, {transform_indices = @transform_3, window_bounds = array<i64: 1, 75, 196>}]} {
    %c0 = arith.constant 0 : index
    %c0_0 = arith.constant 0 : index
    %0 = vector.load %arg3[%c0, %c0_0] : memref<75x63xf32, #tpu.memory_space<vmem>>, vector<75x63xf32>
    %c0_1 = arith.constant 0 : index
    %c0_2 = arith.constant 0 : index
    %c0_3 = arith.constant 0 : index
    %1 = vector.load %arg2[%c0_1, %c0_2, %c0_3] : memref<1x63x196xf32, #tpu.memory_space<vmem>>, vector<1x63x196xf32>
    %2 = vector.shape_cast %1 : vector<1x63x196xf32> to vector<63x196xf32>
    %cst = arith.constant dense<0.000000e+00> : vector<75x196xf32>
    %3 = tpu.matmul %0, %2, %cst {dimension_numbers = #tpu.dot_dimension_numbers<[1], [0], [0], [1], [0, 0, 1, 1], [], []>} : vector<75x63xf32>, vector<63x196xf32>, vector<75x196xf32> -> vector<75x196xf32>
    %c0_4 = arith.constant 0 : index
    %c0_5 = arith.constant 0 : index
    %4 = vector.load %arg4[%c0_4, %c0_5] : memref<75x1xf32, #tpu.memory_space<vmem>>, vector<75x1xf32>
    %5 = vector.broadcast %4 : vector<75x1xf32> to vector<75x196xf32>
    %6 = arith.addf %3, %5 : vector<75x196xf32>
    %cst_6 = arith.constant 0.000000e+00 : f32
    %7 = vector.broadcast %cst_6 : f32 to vector<75x196xf32>
    %8 = arith.cmpf ogt, %6, %7 : vector<75x196xf32>
    %cst_7 = arith.constant 5.000000e-01 : f32
    %9 = vector.broadcast %cst_7 : f32 to vector<75x196xf32>
    %10 = arith.mulf %6, %9 : vector<75x196xf32>
    %11 = arith.select %8, %6, %10 : vector<75x196xi1>, vector<75x196xf32>
    %c0_8 = arith.constant 0 : index
    %c0_9 = arith.constant 0 : index
    %c0_10 = arith.constant 0 : index
    %12 = vector.load %arg5[%c0_8, %c0_9, %c0_10] : memref<1x75x196xf32, #tpu.memory_space<vmem>>, vector<1x75x196xf32>
    %13 = vector.shape_cast %12 : vector<1x75x196xf32> to vector<75x196xf32>
    %14 = vector.shape_cast %11 : vector<75x196xf32> to vector<1x75x196xf32>
    tpu.vector_store %arg5[%c0_8, %c0_9, %c0_10], %14 {strides = array<i32>} : memref<1x75x196xf32, #tpu.memory_space<vmem>>, vector<1x75x196xf32>,
    return
  }
  func.func @transform_0(%arg0: i32, %arg1: i32) -> (i32, i32, i32) {
    %c0_i32 = arith.constant 0 : i32
    %c0_i32_0 = arith.constant 0 : i32
    return %arg0, %c0_i32, %arg1 : i32, i32, i32
  }
  func.func @transform_1(%arg0: i32, %arg1: i32) -> (i32, i32) {
    %c0_i32 = arith.constant 0 : i32
    %c0_i32_0 = arith.constant 0 : i32
    %c0_i32_1 = arith.constant 0 : i32
    return %c0_i32, %c0_i32_0 : i32, i32
  }
  func.func @transform_2(%arg0: i32, %arg1: i32) -> (i32, i32) {
    %c0_i32 = arith.constant 0 : i32
    %c0_i32_0 = arith.constant 0 : i32
    %c0_i32_1 = arith.constant 0 : i32
    return %c0_i32, %c0_i32_0 : i32, i32
  }
  func.func @transform_3(%arg0: i32, %arg1: i32) -> (i32, i32, i32) {
    %c0_i32 = arith.constant 0 : i32
    %c0_i32_0 = arith.constant 0 : i32
    return %arg0, %c0_i32, %arg1 : i32, i32, i32
  }
}

</mosaic_0001>

<llo_original>
// kernel: tpu_custom_call.1
$region0: #{tpu_custom_call.1}
  #allocation0 [shape = 'u32[]', space=smem, size = 0x4, offset = 0x4, fixed_abs, tag = 'smem constant byte address 0x4 - core index']
  #allocation1 [shape = 'u32[144,128]{1,0:T(1,128)}', space=vmem, size = 0x12000, scoped, tag = 'internal scratch']
  %s0 = inlined_call_operand.vmem [shape: f32[2,63,196], index: 0, kind: input, shape index: {}]
  %s1 = inlined_call_operand.vmem [shape: f32[75,63], index: 1, kind: input, shape index: {}]
  %s2 = inlined_call_operand.vmem [shape: f32[75,1], index: 2, kind: input, shape index: {}]
  %s3 = inlined_call_operand.vmem [shape: f32[2,75,196], index: 3, kind: output, shape index: {}]
  %s4 = sld [smem:[#allocation0]]
  $region45: #{tpu_custom_call.1} parent=0
    _
  %s6 = ssub.s32 1, %s4
  %s7 = scalar_select 0, %s6, %s4
  loop: start=0, step=1, limit=4
  $region2: #{tpu_custom_call.1} parent=0 // loop_pre_header
    _
  $region3: #{tpu_custom_call.1} parent=0 // loop_header
    %s9 = sphi 0, %s13
    %p10 = scmp.ge.s32.totalorder %s9, 4
    %s16 = sphi 0, %s28
    %s17 = sphi 0, %s24
    %s18 = sphi 0, %s16
    %s19 = sphi 0, %s17
    %s20 = sphi 0, %s18
    %s21 = sphi 0, %s19
    %s33 = sphi 0, %s35
    %s36 = sphi 0, %s33
    %s37 = sphi 0, %s36
    %s53 = sphi 0, %s37
    %s57 = sphi 0, %s57
    %s59 = sphi 0, %s57
    %s60 = sphi 0, %s59
    %s74 = sphi 0, %s60
    %s78 = sphi 0, %s78
    %s80 = sphi 0, %s78
    %s81 = sphi 0, %s80
    %s95 = sphi 0, %s81
    %s103 = sphi 0, %s105
    %s106 = sphi 0, %s103
    %s107 = sphi 0, %s106
    %s123 = sphi 0, %s107
  $region4: #{tpu_custom_call.1} parent=0 // loop_header_branch
    %12 = sbr.rel (%p10) target = $region8
  $region5: #{tpu_custom_call.1} parent=0 // loop_body
    %s14 = ssub.s32 %s9, 1
    %s15 = ssub.s32 %s9, 2
    %s22 = sadd.s32 1, %s17
    %p23 = scmp.ge.s32.totalorder %s22, 1
    %s24 = scalar_select %p23, 0, %s22
    %s25 = sadd.s32 1, %s16
    %s26 = scalar_select %p23, %s25, %s16
    %p27 = scmp.ge.s32.totalorder %s26, 2
    %s28 = scalar_select %p27, 0, %s26
    %s29 = ssub.s32 %s16, %s28
    %s30 = ssub.s32 %s17, %s24
    %s31 = sor.u32 %s29, %s30
    %p32 = scmp.eq.s32.totalorder %s31, 0
    %s34 = sadd.s32 %s33, 1
    %s35 = scalar_select %p32, %s33, %s34
    %p38 = pneg %p32
    %p39 = scmp.eq.s32.totalorder %s9, 1
    %p40 = por %p38, %p39
    %p41 = scmp.ne.s32.totalorder %s33, %s36
    %p42 = scmp.eq.s32.totalorder %s9, 0
    %p43 = por %p41, %p42
    %p44 = scmp.ne.s32.totalorder %s33, %s36
    %p45 = scmp.eq.s32.totalorder %s14, 1
    %p46 = por %p44, %p45
    %p47 = scmp.ne.s32.totalorder %s36, %s37
    %p48 = scmp.eq.s32.totalorder %s14, 0
    %p49 = por %p47, %p48
    %p50 = scmp.ne.s32.totalorder %s36, %s37
    %p51 = scmp.eq.s32.totalorder %s15, 1
    %p52 = por %p50, %p51
    %p54 = scmp.ne.s32.totalorder %s37, %s53
    %p55 = scmp.eq.s32.totalorder %s15, 0
    %p56 = por %p54, %p55
    %s58 = sadd.s32 %s57, 1
    %p61 = scmp.eq.s32.totalorder %s9, 1
    %p62 = scmp.ne.s32.totalorder %s57, %s59
    %p63 = scmp.eq.s32.totalorder %s9, 0
    %p64 = por %p62, %p63
    %p65 = scmp.ne.s32.totalorder %s57, %s59
    %p66 = scmp.eq.s32.totalorder %s14, 1
    %p67 = por %p65, %p66
    %p68 = scmp.ne.s32.totalorder %s59, %s60
    %p69 = scmp.eq.s32.totalorder %s14, 0
    %p70 = por %p68, %p69
    %p71 = scmp.ne.s32.totalorder %s59, %s60
    %p72 = scmp.eq.s32.totalorder %s15, 1
    %p73 = por %p71, %p72
    %p75 = scmp.ne.s32.totalorder %s60, %s74
    %p76 = scmp.eq.s32.totalorder %s15, 0
    %p77 = por %p75, %p76
    %s79 = sadd.s32 %s78, 1
    %p82 = scmp.eq.s32.totalorder %s9, 1
    %p83 = scmp.ne.s32.totalorder %s78, %s80
    %p84 = scmp.eq.s32.totalorder %s9, 0
    %p85 = por %p83, %p84
    %p86 = scmp.ne.s32.totalorder %s78, %s80
    %p87 = scmp.eq.s32.totalorder %s14, 1
    %p88 = por %p86, %p87
    %p89 = scmp.ne.s32.totalorder %s80, %s81
    %p90 = scmp.eq.s32.totalorder %s14, 0
    %p91 = por %p89, %p90
    %p92 = scmp.ne.s32.totalorder %s80, %s81
    %p93 = scmp.eq.s32.totalorder %s15, 1
    %p94 = por %p92, %p93
    %p96 = scmp.ne.s32.totalorder %s81, %s95
    %p97 = scmp.eq.s32.totalorder %s15, 0
    %p98 = por %p96, %p97
    %s99 = ssub.s32 %s16, %s28
    %s100 = ssub.s32 %s17, %s24
    %s101 = sor.u32 %s99, %s100
    %p102 = scmp.eq.s32.totalorder %s101, 0
    %s104 = sadd.s32 %s103, 1
    %s105 = scalar_select %p102, %s103, %s104
    %p108 = pneg %p102
    %p109 = scmp.eq.s32.totalorder %s9, 1
    %p110 = por %p108, %p109
    %p111 = scmp.ne.s32.totalorder %s103, %s106
    %p112 = scmp.eq.s32.totalorder %s9, 0
    %p113 = por %p111, %p112
    %p114 = scmp.ne.s32.totalorder %s103, %s106
    %p115 = scmp.eq.s32.totalorder %s14, 1
    %p116 = por %p114, %p115
    %p117 = scmp.ne.s32.totalorder %s106, %s107
    %p118 = scmp.eq.s32.totalorder %s14, 0
    %p119 = por %p117, %p118
    %p120 = scmp.ne.s32.totalorder %s106, %s107
    %p121 = scmp.eq.s32.totalorder %s15, 1
    %p122 = por %p120, %p121
    %p124 = scmp.ne.s32.totalorder %s107, %s123
    %p125 = scmp.eq.s32.totalorder %s15, 0
    %p126 = por %p124, %p125
    %p127 = scmp.le.s32.totalorder 1, %s9
    %p128 = scmp.lt.s32.totalorder %s9, 3
    %p129 = pnand %p127, %p128
    %p130 = pneg %p129
    // Predicated region
    $region9: #{tpu_custom_call.1} parent=5 // pred_check
      _
    $region10: #{tpu_custom_call.1} parent=5 // pred_check_branch
      %132 = sbr.rel (%p129) target = $region12
    $region11: #{tpu_custom_call.1} parent=5 // pred_region
      %s133 = ssub.s32 %s9, 1
      // Predicated region
      $region13: #{tpu_custom_call.1} parent=11 // pred_check
        %p134 = pneg %p70
      $region14: #{tpu_custom_call.1} parent=11 // pred_check_branch
        %136 = sbr.rel (%p134) target = $region16
      $region15: #{tpu_custom_call.1} parent=11 // pred_region
        _
      $region16: #{tpu_custom_call.1} parent=11 // pred_fallthru
        _
      // Predicated region
      $region17: #{tpu_custom_call.1} parent=11 // pred_check
        %p137 = pneg %p91
      $region18: #{tpu_custom_call.1} parent=11 // pred_check_branch
        %139 = sbr.rel (%p137) target = $region20
      $region19: #{tpu_custom_call.1} parent=11 // pred_region
        _
      $region20: #{tpu_custom_call.1} parent=11 // pred_fallthru
        _
    $region12: #{tpu_custom_call.1} parent=5 // pred_fallthru
      _
    %p140 = scmp.lt.s32.totalorder %s9, 2
    // Predicated region
    $region21: #{tpu_custom_call.1} parent=5 // pred_check
      %p141 = pneg %p140
    $region22: #{tpu_custom_call.1} parent=5 // pred_check_branch
      %143 = sbr.rel (%p141) target = $region24
    $region23: #{tpu_custom_call.1} parent=5 // pred_region
      // Predicated region
      $region25: #{tpu_custom_call.1} parent=23 // pred_check
        %p144 = pneg %p43
      $region26: #{tpu_custom_call.1} parent=23 // pred_check_branch
        %146 = sbr.rel (%p144) target = $region28
      $region27: #{tpu_custom_call.1} parent=23 // pred_region
        %s147 = smul.u32 2, %s17
        %p148 = scmp.lt.s32.totalorder %s16, 1
        %s149 = scalar_select %p148, %s16, 1
        %p150 = scmp.lt.s32.totalorder %s147, 1
        %s151 = scalar_select %p150, %s147, 1
        %s152 = smul.addr %s149, 16
        %s153 = sadd.s32 %s151, %s152
        %s154 = smul.addr %s153, 8
        %s155 = scalar_lea.vmem %s0, %s154
        %s156 = smul.u32 2, %s17
      $region28: #{tpu_custom_call.1} parent=23 // pred_fallthru
        _
    $region24: #{tpu_custom_call.1} parent=5 // pred_fallthru
      _
    %p157 = scmp.le.s32.totalorder 1, %s9
    %p158 = scmp.lt.s32.totalorder %s9, 3
    %p159 = pnand %p157, %p158
    %p160 = pneg %p159
    // Predicated region
    $region29: #{tpu_custom_call.1} parent=5 // pred_check
      _
    $region30: #{tpu_custom_call.1} parent=5 // pred_check_branch
      %162 = sbr.rel (%p159) target = $region32
    $region31: #{tpu_custom_call.1} parent=5 // pred_region
      %s163 = ssub.s32 %s9, 1
      %s164 = smul.u32 2, %s19
      %p165 = scmp.lt.s32.totalorder %s18, 1
      %s166 = scalar_select %p165, %s18, 1
      %p167 = scmp.lt.s32.totalorder %s164, 1
      %s168 = scalar_select %p167, %s164, 1
      %s169 = smul.addr %s166, 16
      %s170 = sadd.s32 %s168, %s169
      %s171 = smul.addr %s170, 8
      %s172 = scalar_lea.vmem %s0, %s171
      %p173 = pneg %p49
      %p174 = pneg %p46
      %p175 = pneg %p70
      %p176 = pneg %p67
      %p177 = pneg %p91
      %p178 = pneg %p88
      %p179 = pneg %p119
      %p180 = pneg %p116
      %s181 = smul.u32 2, %s19
      %p182 = scmp.lt.s32.totalorder %s18, 1
      %s183 = scalar_select %p182, %s18, 1
      %p184 = scmp.lt.s32.totalorder %s181, 1
      %s185 = scalar_select %p184, %s181, 1
      %s186 = smul.addr %s183, 20
      %s187 = sadd.s32 %s185, %s186
      %s188 = smul.addr %s187, 8
      %s189 = scalar_lea.vmem %s3, %s188
      %s190 = smul.u32 2, %s19
      %p191 = scmp.lt.s32.totalorder %s18, 1
      %s192 = scalar_select %p191, %s18, 1
      %p193 = scmp.lt.s32.totalorder %s190, 1
      %s194 = scalar_select %p193, %s190, 1
      %s195 = smul.addr %s192, 16
      %s196 = sadd.s32 %s194, %s195
      %s197 = smul.addr %s196, 8
      %s198 = scalar_lea.vmem %s0, %s197
      %s199 = smul.u32 2, %s19
      %s200 = smul.u32 2, %s19
      %p201 = scmp.lt.s32.totalorder %s18, 1
      %s202 = scalar_select %p201, %s18, 1
      %p203 = scmp.lt.s32.totalorder %s200, 1
      %s204 = scalar_select %p203, %s200, 1
      %s205 = smul.addr %s202, 20
      %s206 = sadd.s32 %s204, %s205
      %s207 = smul.addr %s206, 8
      %s208 = scalar_lea.vmem %s3, %s207
      %s209 = smul.u32 2, %s19
      %v210 = vld [vmem:[%s1] sm:$0xff]
      %v211 = vld [vmem:[%s1 + $0x8] sm:$0xff]
      %v212 = vld [vmem:[%s1 + $0x10] sm:$0xff]
      %v213 = vld [vmem:[%s1 + $0x18] sm:$0xff]
      %v214 = vld [vmem:[%s1 + $0x20] sm:$0xff]
      %v215 = vld [vmem:[%s1 + $0x28] sm:$0xff]
      %v216 = vld [vmem:[%s1 + $0x30] sm:$0xff]
      %v217 = vld [vmem:[%s1 + $0x38] sm:$0xff]
      %v218 = vld [vmem:[%s1 + $0x40] sm:$0xff]
      %v219 = vld [vmem:[%s1 + $0x48] sm:$0x7]
      %v220 = vld [vmem:[%s198] sm:$0xff]
      %v221 = vld [vmem:[%s198 + $0x8] sm:$0xff]
      %v222 = vld [vmem:[%s198 + $0x10] sm:$0xff]
      %v223 = vld [vmem:[%s198 + $0x18] sm:$0xff]
      %v224 = vld [vmem:[%s198 + $0x20] sm:$0xff]
      %v225 = vld [vmem:[%s198 + $0x28] sm:$0xff]
      %v226 = vld [vmem:[%s198 + $0x30] sm:$0xff]
      %v227 = vld [vmem:[%s198 + $0x38] sm:$0xff]
      %v228 = vld [vmem:[%s198 + $0x40] sm:$0xff]
      %v229 = vld [vmem:[%s198 + $0x48] sm:$0xff]
      %v230 = vld [vmem:[%s198 + $0x50] sm:$0xff]
      %v231 = vld [vmem:[%s198 + $0x58] sm:$0xff]
      %v232 = vld [vmem:[%s198 + $0x60] sm:$0xff]
      %v233 = vld [vmem:[%s198 + $0x68] sm:$0xff]
      %v234 = vld [vmem:[%s198 + $0x70] sm:$0x7f]
      %v235 = vld [vmem:[%s198 + $0x78] sm:$0x7f]
      %v236 = vld [vmem:[%s2] sm:$0xff]
      %v237 = vld [vmem:[%s2 + $0x8] sm:$0xff]
      %v238 = vld [vmem:[%s2 + $0x10] sm:$0xff]
      %v239 = vld [vmem:[%s2 + $0x18] sm:$0xff]
      %v240 = vld [vmem:[%s2 + $0x20] sm:$0xff]
      %v241 = vld [vmem:[%s2 + $0x28] sm:$0xff]
      %v242 = vld [vmem:[%s2 + $0x30] sm:$0xff]
      %v243 = vld [vmem:[%s2 + $0x38] sm:$0xff]
      %v244 = vld [vmem:[%s2 + $0x40] sm:$0xff]
      %v245 = vld [vmem:[%s2 + $0x48] sm:$0x7]
      %247 = vset.pattern.permute.xlu0 0
      %248 = vperm.xlu0 %247, %v236
      %v249 = vpop.permute.xlu0 %248
      %252 = vset.pattern.permute.xlu0 0
      %253 = vperm.xlu0 %252, %v237
      %v254 = vpop.permute.xlu0 %253
      %257 = vset.pattern.permute.xlu0 0
      %258 = vperm.xlu0 %257, %v238
      %v259 = vpop.permute.xlu0 %258
      %262 = vset.pattern.permute.xlu0 0
      %263 = vperm.xlu0 %262, %v239
      %v264 = vpop.permute.xlu0 %263
      %267 = vset.pattern.permute.xlu0 0
      %268 = vperm.xlu0 %267, %v240
      %v269 = vpop.permute.xlu0 %268
      %272 = vset.pattern.permute.xlu0 0
      %273 = vperm.xlu0 %272, %v241
      %v274 = vpop.permute.xlu0 %273
      %277 = vset.pattern.permute.xlu0 0
      %278 = vperm.xlu0 %277, %v242
      %v279 = vpop.permute.xlu0 %278
      %282 = vset.pattern.permute.xlu0 0
      %283 = vperm.xlu0 %282, %v243
      %v284 = vpop.permute.xlu0 %283
      %287 = vset.pattern.permute.xlu0 0
      %288 = vperm.xlu0 %287, %v244
      %v289 = vpop.permute.xlu0 %288
      %292 = vset.pattern.permute.xlu0 0
      %293 = vperm.xlu0 %292, %v245
      %v294 = vpop.permute.xlu0 %293
      %vm296 = vcmask 515072
      %v298 = vsel %vm296, %v210, 0
      %v301 = vsel %vm296, %v211, 0
      %v304 = vsel %vm296, %v212, 0
      %v307 = vsel %vm296, %v213, 0
      %v310 = vsel %vm296, %v214, 0
      %v313 = vsel %vm296, %v215, 0
      %v316 = vsel %vm296, %v216, 0
      %v319 = vsel %vm296, %v217, 0
      %v322 = vsel %vm296, %v218, 0
      %v325 = vsel %vm296, %v219, 0
      %vm327 = vcmask 1046528
      %v329 = vsel %vm327, %v234, 0
      %v332 = vsel %vm327, %v235, 0
      %334 = vmatprep.subr.mxu0 %v221
      %335 = vmatpush1.msra.mxu0 %v220
      %336 = vmatprep.subr.mxu0 %v223
      %337 = vmatpush1.msra.mxu0 %v222
      %338 = vmatprep.subr.mxu0 %v225
      %339 = vmatpush1.msra.mxu0 %v224
      %340 = vmatprep.subr.mxu0 %v227
      %341 = vmatpush1.msra.mxu0 %v226
      %342 = vmatprep.subr.mxu0 %v229
      %343 = vmatpush1.msra.mxu0 %v228
      %344 = vmatprep.subr.mxu0 %v231
      %345 = vmatpush1.msra.mxu0 %v230
      %346 = vmatprep.subr.mxu0 %v233
      %347 = vmatpush1.msra.mxu0 %v232
      %348 = vmatprep.subr.mxu0 %v332
      %349 = vmatpush1.msra.mxu0 %v329
      %350 = vmatprep.subr.mxu0 0.0
      %351 = vmatpush1.msra.mxu0 0.0
      %352 = vmatprep.subr.mxu0 0.0
      %353 = vmatpush1.msra.mxu0 0.0
      %354 = vmatprep.subr.mxu0 0.0
      %355 = vmatpush1.msra.mxu0 0.0
      %356 = vmatprep.subr.mxu0 0.0
      %357 = vmatpush1.msra.mxu0 0.0
      %358 = vmatprep.subr.mxu0 0.0
      %359 = vmatpush1.msra.mxu0 0.0
      %360 = vmatprep.subr.mxu0 0.0
      %361 = vmatpush1.msra.mxu0 0.0
      %362 = vmatprep.subr.mxu0 0.0
      %363 = vmatpush1.msra.mxu0 0.0
      %364 = vmatprep.subr.mxu0 0.0
      %365 = vmatpush1.msra.mxu0 0.0
      %366 = vmatprep.subr.mxu0 0.0
      %367 = vmatpush1.msra.mxu0 0.0
      %368 = vmatprep.subr.mxu0 0.0
      %369 = vmatpush1.msra.mxu0 0.0
      %370 = vmatprep.subr.mxu0 0.0
      %371 = vmatpush1.msra.mxu0 0.0
      %372 = vmatprep.subr.mxu0 0.0
      %373 = vmatpush1.msra.mxu0 0.0
      %374 = vmatprep.subr.mxu0 0.0
      %375 = vmatpush1.msra.mxu0 0.0
      %376 = vmatprep.subr.mxu0 0.0
      %377 = vmatpush1.msra.mxu0 0.0
      %378 = vmatprep.subr.mxu0 0.0
      %379 = vmatpush1.msra.mxu0 0.0
      %380 = vmatprep.subr.mxu0 0.0
      %381 = vmatpush1.msra.mxu0 0.0
      %382 = vmatprep.subr.mxu0 0.0
      %383 = vmatpush1.msra.mxu0 0.0
      %384 = vmatprep.subr.mxu0 0.0
      %385 = vmatpush1.msra.mxu0 0.0
      %386 = vmatprep.subr.mxu0 0.0
      %387 = vmatpush1.msra.mxu0 0.0
      %388 = vmatprep.subr.mxu0 0.0
      %389 = vmatpush1.msra.mxu0 0.0
      %390 = vmatprep.subr.mxu0 0.0
      %391 = vmatpush1.msra.mxu0 0.0
      %392 = vmatprep.subr.mxu0 0.0
      %393 = vmatpush1.msra.mxu0 0.0
      %394 = vmatprep.subr.mxu0 0.0
      %395 = vmatpush1.msra.mxu0 0.0
      %396 = vmatprep.subr.mxu0 0.0
      %397 = vmatpush1.msra.mxu0 0.0
      %398 = vmatprep.mubr.f32.mxu0 0.0
      %399 = vmatmul.mubr.f32.gmra.mrb[0].mxu0 %v298
      %v400 = vpop.f32.mrb[0].mxu0
      %v401 = vadd.f32 %v249, %v400
      %v402 = vpop.f32.mrb[0].mxu0
      %v403 = vadd.f32 %v249, %v402
      %404 = vmatprep.mubr.f32.mxu0 0.0
      %405 = vmatmul.mubr.f32.gmra.mrb[0].mxu0 %v301
      %v406 = vpop.f32.mrb[0].mxu0
      %v407 = vadd.f32 %v254, %v406
      %v408 = vpop.f32.mrb[0].mxu0
      %v409 = vadd.f32 %v254, %v408
      %410 = vmatprep.mubr.f32.mxu0 0.0
      %411 = vmatmul.mubr.f32.gmra.mrb[0].mxu0 %v304
      %v412 = vpop.f32.mrb[0].mxu0
      %v413 = vadd.f32 %v259, %v412
      %v414 = vpop.f32.mrb[0].mxu0
      %v415 = vadd.f32 %v259, %v414
      %416 = vmatprep.mubr.f32.mxu0 0.0
      %417 = vmatmul.mubr.f32.gmra.mrb[0].mxu0 %v307
      %v418 = vpop.f32.mrb[0].mxu0
      %v419 = vadd.f32 %v264, %v418
      %v420 = vpop.f32.mrb[0].mxu0
      %v421 = vadd.f32 %v264, %v420
      %422 = vmatprep.mubr.f32.mxu0 0.0
      %423 = vmatmul.mubr.f32.gmra.mrb[0].mxu0 %v310
      %v424 = vpop.f32.mrb[0].mxu0
      %v425 = vadd.f32 %v269, %v424
      %v426 = vpop.f32.mrb[0].mxu0
      %v427 = vadd.f32 %v269, %v426
      %428 = vmatprep.mubr.f32.mxu0 0.0
      %429 = vmatmul.mubr.f32.gmra.mrb[0].mxu0 %v313
      %v430 = vpop.f32.mrb[0].mxu0
      %v431 = vadd.f32 %v274, %v430
      %v432 = vpop.f32.mrb[0].mxu0
      %v433 = vadd.f32 %v274, %v432
      %434 = vmatprep.mubr.f32.mxu0 0.0
      %435 = vmatmul.mubr.f32.gmra.mrb[0].mxu0 %v316
      %v436 = vpop.f32.mrb[0].mxu0
      %v437 = vadd.f32 %v279, %v436
      %v438 = vpop.f32.mrb[0].mxu0
      %v439 = vadd.f32 %v279, %v438
      %440 = vmatprep.mubr.f32.mxu0 0.0
      %441 = vmatmul.mubr.f32.gmra.mrb[0].mxu0 %v319
      %v442 = vpop.f32.mrb[0].mxu0
      %v443 = vadd.f32 %v284, %v442
      %v444 = vpop.f32.mrb[0].mxu0
      %v445 = vadd.f32 %v284, %v444
      %446 = vmatprep.mubr.f32.mxu0 0.0
      %447 = vmatmul.mubr.f32.gmra.mrb[0].mxu0 %v322
      %v448 = vpop.f32.mrb[0].mxu0
      %v449 = vadd.f32 %v289, %v448
      %v450 = vpop.f32.mrb[0].mxu0
      %v451 = vadd.f32 %v289, %v450
      %452 = vmatprep.mubr.f32.mxu0 0.0
      %453 = vmatmul.mubr.f32.gmra.mrb[0].mxu0 %v325
      %v454 = vpop.f32.mrb[0].mxu0
      %v455 = vadd.f32 %v294, %v454
      %v456 = vpop.f32.mrb[0].mxu0
      %v457 = vadd.f32 %v294, %v456
      %458 = vdwg.mxu0
      %vm459 = vcmp.gt.f32.partialorder %v401, 0.0
      %vm460 = vcmp.gt.f32.partialorder %v403, 0.0
      %vm461 = vcmp.gt.f32.partialorder %v407, 0.0
      %vm462 = vcmp.gt.f32.partialorder %v409, 0.0
      %vm463 = vcmp.gt.f32.partialorder %v413, 0.0
      %vm464 = vcmp.gt.f32.partialorder %v415, 0.0
      %vm465 = vcmp.gt.f32.partialorder %v419, 0.0
      %vm466 = vcmp.gt.f32.partialorder %v421, 0.0
      %vm467 = vcmp.gt.f32.partialorder %v425, 0.0
      %vm468 = vcmp.gt.f32.partialorder %v427, 0.0
      %vm469 = vcmp.gt.f32.partialorder %v431, 0.0
      %vm470 = vcmp.gt.f32.partialorder %v433, 0.0
      %vm471 = vcmp.gt.f32.partialorder %v437, 0.0
      %vm472 = vcmp.gt.f32.partialorder %v439, 0.0
      %vm473 = vcmp.gt.f32.partialorder %v443, 0.0
      %vm474 = vcmp.gt.f32.partialorder %v445, 0.0
      %vm475 = vcmp.gt.f32.partialorder %v449, 0.0
      %vm476 = vcmp.gt.f32.partialorder %v451, 0.0
      %vm477 = vcmp.gt.f32.partialorder %v455, 0.0
      %vm478 = vcmp.gt.f32.partialorder %v457, 0.0
      %v479 = vmul.f32 %v401, 0.5
      %v480 = vmul.f32 %v403, 0.5
      %v481 = vmul.f32 %v407, 0.5
      %v482 = vmul.f32 %v409, 0.5
      %v483 = vmul.f32 %v413, 0.5
      %v484 = vmul.f32 %v415, 0.5
      %v485 = vmul.f32 %v419, 0.5
      %v486 = vmul.f32 %v421, 0.5
      %v487 = vmul.f32 %v425, 0.5
      %v488 = vmul.f32 %v427, 0.5
      %v489 = vmul.f32 %v431, 0.5
      %v490 = vmul.f32 %v433, 0.5
      %v491 = vmul.f32 %v437, 0.5
      %v492 = vmul.f32 %v439, 0.5
      %v493 = vmul.f32 %v443, 0.5
      %v494 = vmul.f32 %v445, 0.5
      %v495 = vmul.f32 %v449, 0.5
      %v496 = vmul.f32 %v451, 0.5
      %v497 = vmul.f32 %v455, 0.5
      %v498 = vmul.f32 %v457, 0.5
      %v499 = vsel %vm459, %v401, %v479
      %v500 = vsel %vm460, %v403, %v480
      %v501 = vsel %vm461, %v407, %v481
      %v502 = vsel %vm462, %v409, %v482
      %v503 = vsel %vm463, %v413, %v483
      %v504 = vsel %vm464, %v415, %v484
      %v505 = vsel %vm465, %v419, %v485
      %v506 = vsel %vm466, %v421, %v486
      %v507 = vsel %vm467, %v425, %v487
      %v508 = vsel %vm468, %v427, %v488
      %v509 = vsel %vm469, %v431, %v489
      %v510 = vsel %vm470, %v433, %v490
      %v511 = vsel %vm471, %v437, %v491
      %v512 = vsel %vm472, %v439, %v492
      %v513 = vsel %vm473, %v443, %v493
      %v514 = vsel %vm474, %v445, %v494
      %v515 = vsel %vm475, %v449, %v495
      %v516 = vsel %vm476, %v451, %v496
      %v517 = vsel %vm477, %v455, %v497
      %v518 = vsel %vm478, %v457, %v498
      %519 = vst [vmem:[%s208] sm:$0xff] %v499
      %vm520 = vcmask 556032
      %521 = vst.msk [vmem:[%s208 + $0x8] sm:$0xff] %vm520, %v500
      %522 = vst [vmem:[%s208 + $0x10] sm:$0xff] %v501
      %523 = vst.msk [vmem:[%s208 + $0x18] sm:$0xff] %vm520, %v502
      %524 = vst [vmem:[%s208 + $0x20] sm:$0xff] %v503
      %525 = vst.msk [vmem:[%s208 + $0x28] sm:$0xff] %vm520, %v504
      %526 = vst [vmem:[%s208 + $0x30] sm:$0xff] %v505
      %527 = vst.msk [vmem:[%s208 + $0x38] sm:$0xff] %vm520, %v506
      %528 = vst [vmem:[%s208 + $0x40] sm:$0xff] %v507
      %529 = vst.msk [vmem:[%s208 + $0x48] sm:$0xff] %vm520, %v508
      %530 = vst [vmem:[%s208 + $0x50] sm:$0xff] %v509
      %531 = vst.msk [vmem:[%s208 + $0x58] sm:$0xff] %vm520, %v510
      %532 = vst [vmem:[%s208 + $0x60] sm:$0xff] %v511
      %533 = vst.msk [vmem:[%s208 + $0x68] sm:$0xff] %vm520, %v512
      %534 = vst [vmem:[%s208 + $0x70] sm:$0xff] %v513
      %535 = vst.msk [vmem:[%s208 + $0x78] sm:$0xff] %vm520, %v514
      %536 = vst [vmem:[%s208 + $0x80] sm:$0xff] %v515
      %537 = vst.msk [vmem:[%s208 + $0x88] sm:$0xff] %vm520, %v516
      %538 = vst [vmem:[%s208 + $0x90] sm:$0x7] %v517
      %vm539 = vcmask 550912
      %540 = vst.msk [vmem:[%s208 + $0x98] sm:$0x7] %vm539, %v518
      %s541 = smul.u32 2, %s19
      %p542 = scmp.lt.s32.totalorder %s18, 1
      %s543 = scalar_select %p542, %s18, 1
      %p544 = scmp.lt.s32.totalorder %s541, 1
      %s545 = scalar_select %p544, %s541, 1
      %s546 = smul.addr %s543, 20
      %s547 = sadd.s32 %s545, %s546
      %s548 = smul.addr %s547, 8
      %s549 = scalar_lea.vmem %s3, %s548
      // Predicated region
      $region33: #{tpu_custom_call.1} parent=31 // pred_check
        %p550 = pneg %p116
      $region34: #{tpu_custom_call.1} parent=31 // pred_check_branch
        %552 = sbr.rel (%p550) target = $region36
      $region35: #{tpu_custom_call.1} parent=31 // pred_region
        %s553 = smul.u32 2, %s19
      $region36: #{tpu_custom_call.1} parent=31 // pred_fallthru
        _
    $region32: #{tpu_custom_call.1} parent=5 // pred_fallthru
      _
    %p554 = scmp.le.s32.totalorder 2, %s9
    // Predicated region
    $region37: #{tpu_custom_call.1} parent=5 // pred_check
      %p555 = pneg %p554
    $region38: #{tpu_custom_call.1} parent=5 // pred_check_branch
      %557 = sbr.rel (%p555) target = $region40
    $region39: #{tpu_custom_call.1} parent=5 // pred_region
      %s558 = ssub.s32 %s9, 2
      // Predicated region
      $region41: #{tpu_custom_call.1} parent=39 // pred_check
        %p559 = pneg %p122
      $region42: #{tpu_custom_call.1} parent=39 // pred_check_branch
        %561 = sbr.rel (%p559) target = $region44
      $region43: #{tpu_custom_call.1} parent=39 // pred_region
        %s562 = smul.u32 2, %s21
        %p563 = scmp.lt.s32.totalorder %s20, 1
        %s564 = scalar_select %p563, %s20, 1
        %p565 = scmp.lt.s32.totalorder %s562, 1
        %s566 = scalar_select %p565, %s562, 1
        %s567 = smul.addr %s564, 20
        %s568 = sadd.s32 %s566, %s567
        %s569 = smul.addr %s568, 8
        %s570 = scalar_lea.vmem %s3, %s569
      $region44: #{tpu_custom_call.1} parent=39 // pred_fallthru
        _
    $region40: #{tpu_custom_call.1} parent=5 // pred_fallthru
      _
  $region6: #{tpu_custom_call.1} parent=0 // loop_footer
    %s13 = sadd.s32 1, %s9
  $region7: #{tpu_custom_call.1} parent=0 // loop_footer_branch
    %8 = sbr.rel target = $region3
  $region8: #{tpu_custom_call.1} parent=0 // loop_exit
    _

</llo_original>
